<compile_context>
chip_gen: v7x
topology: tpu7x:2x2x1
jax: 0.10.0
libtpu: 0.0.40
codegen_flags: <defaults>
</compile_context>

<pallas_src>
import functools

import jax
import jax.numpy as jnp
from jax.experimental import pallas as pl
from jax.experimental.pallas import tpu as pltpu

_LANE = 128
_SUBLANE = 8
_MAX_TILE_ROWS = 1024  # (1024,128) f32 = 512 KiB per tile


def _round_up(a, b):
    return ((a + b - 1) // b) * b


def _partial_minmax_kernel(x_ref, pmin_ref, pmax_ref, *, tile_rows, n_valid, needs_mask):
    """Per-block partial min/max, folded to an (8, 128) slab with VPU elementwise ops."""
    tile = x_ref[...].astype(jnp.float32)                        # (tile_rows, 128)
    if needs_mask:
        i = pl.program_id(0)
        row_id = i * tile_rows + jax.lax.broadcasted_iota(
            jnp.int32, (tile_rows, _LANE), 0)
        lane_id = jax.lax.broadcasted_iota(jnp.int32, (tile_rows, _LANE), 1)
        valid = row_id * _LANE + lane_id < n_valid
        tmin = jnp.where(valid, tile, jnp.inf)
        tmax = jnp.where(valid, tile, -jnp.inf)
    else:
        tmin = tile
        tmax = tile
    # Fold (tile_rows, 128) -> (8, 128): elementwise vreg min/max, no XLU per step.
    grp = tile_rows // _SUBLANE
    pmin_ref[...] = jnp.min(tmin.reshape(grp, _SUBLANE, _LANE), axis=0)
    pmax_ref[...] = jnp.max(tmax.reshape(grp, _SUBLANE, _LANE), axis=0)


def _fake_quant_kernel(qp_ref, x_ref, o_ref, *, quant_min, quant_max, zero_point):
    """Elementwise fake quantization; scale / inv_scale live in SMEM."""
    s = qp_ref[0]
    inv_s = qp_ref[1]
    xv = x_ref[...].astype(jnp.float32)
    q = jnp.round(xv * inv_s + jnp.float32(zero_point))          # round-half-to-even,
    q = jnp.clip(q, jnp.float32(quant_min), jnp.float32(quant_max))  # same as nearbyint
    o_ref[...] = ((q - jnp.float32(zero_point)) * s).astype(o_ref.dtype)


def example_fq_forward(x, float_min, float_max, *, quant_min=0, quant_max=255,
                       ch_axis=0, averaging_constant=0.01):
    """Returns (fake-quantized X, new_float_min, new_float_max)."""
    del ch_axis  # 1-element scale with per-channel axis == per-tensor affine
    orig_shape = x.shape
    orig_dtype = x.dtype
    acc_dtype = jnp.float32  # float_min.dtype

    flat = x.reshape(-1)
    n = flat.shape[0]
    assert n > 0, "example_FQ.forward on an empty tensor is undefined"

    lane_pad = (-n) % _LANE
    if lane_pad:
        # Rare unaligned tail: pad to a lane multiple so the 2-D reshape is legal.
        flat = jnp.pad(flat, (0, lane_pad))
    rows = flat.shape[0] // _LANE
    x2d = flat.reshape(rows, _LANE)              # zero-copy reshape when lane_pad == 0

    tile_rows = min(_MAX_TILE_ROWS, _round_up(rows, _SUBLANE))
    num_blocks = pl.cdiv(rows, tile_rows)
    needs_mask = (num_blocks * tile_rows * _LANE) != n   # static: tail masking needed?

    # ---- pass 1: parallel partial min / max reduction -------------------------------
    mm_kernel = functools.partial(_partial_minmax_kernel, tile_rows=tile_rows,
                                  n_valid=n, needs_mask=needs_mask)
    pmin, pmax = pl.pallas_call(
        mm_kernel,
        out_shape=(jax.ShapeDtypeStruct((num_blocks * _SUBLANE, _LANE), acc_dtype),
                   jax.ShapeDtypeStruct((num_blocks * _SUBLANE, _LANE), acc_dtype)),
        grid=(num_blocks,),
        in_specs=[pl.BlockSpec((tile_rows, _LANE), lambda i: (i, 0))],
        out_specs=(pl.BlockSpec((_SUBLANE, _LANE), lambda i: (i, 0)),
                   pl.BlockSpec((_SUBLANE, _LANE), lambda i: (i, 0))),
        compiler_params=pltpu.CompilerParams(dimension_semantics=("parallel",)),
    )(x2d)
    x_min = jnp.min(pmin)
    x_max = jnp.max(pmax)

    # ---- EMA buffer update + qparams (tiny scalar glue, plain JAX) ------------------
    new_min = (float_min + averaging_constant * (x_min - float_min)).astype(acc_dtype)
    new_max = (float_max + averaging_constant * (x_max - float_max)).astype(acc_dtype)
    scale = (new_max - new_min) / float(quant_max - quant_min)
    # Guard against a degenerate zero range (only differs from the PyTorch module in
    # the case where PyTorch itself would produce inf/NaN).
    scale = jnp.maximum(scale, jnp.finfo(jnp.float32).eps)
    inv_scale = 1.0 / scale                       # PyTorch fake-quant also uses 1/scale
    qparams = jnp.concatenate([scale, inv_scale]).astype(jnp.float32)   # shape (2,)
    zp = quant_min                                # calculate_qparams: zp = quant_min

    # ---- pass 2: elementwise fake quantization (orig dtype in / out) ----------------
    fq_kernel = functools.partial(_fake_quant_kernel, quant_min=quant_min,
                                  quant_max=quant_max, zero_point=zp)
    y2d = pl.pallas_call(
        fq_kernel,
        out_shape=jax.ShapeDtypeStruct((rows, _LANE), orig_dtype),
        grid=(num_blocks,),
        in_specs=[pl.BlockSpec(memory_space=pltpu.SMEM),
                  pl.BlockSpec((tile_rows, _LANE), lambda i: (i, 0))],
        out_specs=pl.BlockSpec((tile_rows, _LANE), lambda i: (i, 0)),
        compiler_params=pltpu.CompilerParams(dimension_semantics=("parallel",)),
    )(qparams, x2d)

    if lane_pad:
        y = y2d.reshape(-1)[:n].reshape(orig_shape)
    else:
        y = y2d.reshape(orig_shape)
    return y, new_min, new_max


if __name__ == "__main__":
    key = jax.random.PRNGKey(0)
    # NCHW activation, as the PyTorch module would typically observe.
    x = jax.random.normal(key, (2, 4, 16, 16), dtype=jnp.float32) * 3.0

    # Deterministic module state from __init__.
    float_min = jnp.array([-1.0], dtype=jnp.float32)
    float_max = jnp.array([1.0], dtype=jnp.float32)

    y, new_min, new_max = example_fq_forward(
        x, float_min, float_max,
        quant_min=0, quant_max=255, ch_axis=0, averaging_constant=0.01)
    jax.block_until_ready((y, new_min, new_max))

    # Sanity check against a pure-JAX reference of the same math.
    x_min = jnp.min(x)
    x_max = jnp.max(x)
    ref_min = float_min + 0.01 * (x_min - float_min)
    ref_max = float_max + 0.01 * (x_max - float_max)
    ref_scale = (ref_max - ref_min) / 255.0
    ref_inv = 1.0 / ref_scale
    ref_q = jnp.clip(jnp.round(x * ref_inv), 0.0, 255.0)
    ref_y = ref_q * ref_scale

    assert y.shape == x.shape and y.dtype == x.dtype
    assert jnp.allclose(new_min, ref_min, atol=1e-6)
    assert jnp.allclose(new_max, ref_max, atol=1e-6)
    assert jnp.allclose(y, ref_y, atol=1e-5)
    print("KERNEL_OK")
</pallas_src>

<mosaic_0001>
module attributes {stable_mosaic.version = 11 : i64} {
  func.func @_partial_minmax_kernel(%arg0: i32, %arg1: memref<16x128xf32, #tpu.memory_space<vmem>>, %arg2: memref<8x128xf32, #tpu.memory_space<vmem>>, %arg3: memref<8x128xf32, #tpu.memory_space<vmem>>) attributes {dimension_semantics = [#tpu.dimension_semantics<parallel>], iteration_bounds = array<i64: 1>, scalar_prefetch = 0 : i64, scratch_operands = 0 : i64, tpu.core_type = #tpu.core_type<tc>, window_params = [{transform_indices = @transform_0, window_bounds = array<i64: 16, 128>}, {transform_indices = @transform_1, window_bounds = array<i64: 8, 128>}, {transform_indices = @transform_2, window_bounds = array<i64: 8, 128>}]} {
    %c0 = arith.constant 0 : index
    %c0_0 = arith.constant 0 : index
    %0 = vector.load %arg1[%c0, %c0_0] : memref<16x128xf32, #tpu.memory_space<vmem>>, vector<16x128xf32>
    %1 = vector.shape_cast %0 : vector<16x128xf32> to vector<2x8x128xf32>
    %cst = arith.constant dense<0x7F800000> : vector<8x128xf32>
    %2 = vector.multi_reduction <minimumf>, %1, %cst [0] : vector<2x8x128xf32> to vector<8x128xf32>
    %c0_1 = arith.constant 0 : index
    %c0_2 = arith.constant 0 : index
    %3 = vector.load %arg2[%c0_1, %c0_2] : memref<8x128xf32, #tpu.memory_space<vmem>>, vector<8x128xf32>
    tpu.vector_store %arg2[%c0_1, %c0_2], %2 {strides = array<i32>} : memref<8x128xf32, #tpu.memory_space<vmem>>, vector<8x128xf32>,
    %4 = vector.shape_cast %0 : vector<16x128xf32> to vector<2x8x128xf32>
    %cst_3 = arith.constant dense<0xFF800000> : vector<8x128xf32>
    %5 = vector.multi_reduction <maximumf>, %4, %cst_3 [0] : vector<2x8x128xf32> to vector<8x128xf32>
    %c0_4 = arith.constant 0 : index
    %c0_5 = arith.constant 0 : index
    %6 = vector.load %arg3[%c0_4, %c0_5] : memref<8x128xf32, #tpu.memory_space<vmem>>, vector<8x128xf32>
    tpu.vector_store %arg3[%c0_4, %c0_5], %5 {strides = array<i32>} : memref<8x128xf32, #tpu.memory_space<vmem>>, vector<8x128xf32>,
    return
  }
  func.func @transform_0(%arg0: i32) -> (i32, i32) {
    %c0_i32 = arith.constant 0 : i32
    %c0_i32_0 = arith.constant 0 : i32
    return %arg0, %c0_i32 : i32, i32
  }
  func.func @transform_1(%arg0: i32) -> (i32, i32) {
    %c0_i32 = arith.constant 0 : i32
    %c0_i32_0 = arith.constant 0 : i32
    return %arg0, %c0_i32 : i32, i32
  }
  func.func @transform_2(%arg0: i32) -> (i32, i32) {
    %c0_i32 = arith.constant 0 : i32
    %c0_i32_0 = arith.constant 0 : i32
    return %arg0, %c0_i32 : i32, i32
  }
}

</mosaic_0001>

<llo_original>
// kernel: tpu_custom_call.1
$region0: #{tpu_custom_call.1}
  #allocation0 [shape = 'u32[]', space=smem, size = 0x4, offset = 0x4, fixed_abs, tag = 'smem constant byte address 0x4 - core index']
  #allocation1 [shape = 'u32[144,128]{1,0:T(1,128)}', space=vmem, size = 0x12000, scoped, tag = 'internal scratch']
  %s0 = inlined_call_operand.hbm [shape: f32[16,128], index: 0, kind: input, shape index: {}]
  %s1 = inlined_call_operand.hbm [shape: f32[8,128], index: 1, kind: output, shape index: {0}]
  %s2 = inlined_call_operand.hbm [shape: f32[8,128], index: 2, kind: output, shape index: {1}]
  %3 = xla_tuple %s1, %s2
  %s4 = sld [smem:[#allocation0]]
  $region26: #{tpu_custom_call.1} parent=0
    _
  %s6 = ssub.s32 1, %s4
  %s7 = scalar_select 0, %s6, %s4
  $region1: #{tpu_custom_call.1} parent=0
    #allocation2 [shape = 'u8[8192]{0}', space=vmem, size = 0x2000, scoped, tag = 'input window, operand 0, single buffered']
    #allocation3 [shape = 's32[1]{0}', space=sflag, size = 0x4, scoped, tag = 'scoped memory for tpu_custom_call.1']
    #allocation4 [shape = 's32[1]{0}', space=sflag, size = 0x4, scoped, tag = 'scoped memory for tpu_custom_call.1']
    #allocation5 [shape = 'u8[4096]{0}', space=vmem, size = 0x1000, scoped, tag = 'output window, operand 0, single buffered']
    #allocation6 [shape = 'u8[4096]{0}', space=vmem, size = 0x1000, scoped, tag = 'output window, operand 1, single buffered']
    #allocation7 [shape = 's32[1]{0}', space=sflag, size = 0x4, scoped, tag = 'scoped memory for tpu_custom_call.1']
    %8 = vsyncpa [#allocation3], 0
    %9 = vsyncpa [#allocation4], 0
    %10 = vsyncpa [#allocation7], 0
    // Predicated region
    $region2: #{tpu_custom_call.1} parent=1 // pred_check
      _
    $region3: #{tpu_custom_call.1} parent=1 // pred_check_branch
      %12 = sbr.rel (0) target = $region5
    $region4: #{tpu_custom_call.1} parent=1 // pred_region
      %s14 = ssub.s32 256, 256
      %15 = vsyncadd [#allocation3], %s14
      %s16 = sshll.u32 [#allocation2], 4
      %s17 = int_to_ptr.vmem [resolvable:$true] %s16
      %22 = dma.hbm_to_vmem [thread:$0]  %s0, 256, %s17, [#allocation3], 128, 128, 8
    $region5: #{tpu_custom_call.1} parent=1 // pred_fallthru
      _
    // Predicated region
    $region6: #{tpu_custom_call.1} parent=1 // pred_check
      _
    $region7: #{tpu_custom_call.1} parent=1 // pred_check_branch
      %24 = sbr.rel (0) target = $region9
    $region8: #{tpu_custom_call.1} parent=1 // pred_region
      %25 = dma.done [#allocation3], 256
    $region9: #{tpu_custom_call.1} parent=1 // pred_fallthru
      _
    %v26 = vld [vmem:[#allocation2] sm:$0xff]
    %v27 = vld [vmem:[#allocation2 + $0x8] sm:$0xff]
    %v28 = vmin.f32 %v26, %v27
    %29 = vst [vmem:[#allocation5] sm:$0xff] %v28
    %v30 = vmax.f32 %v26, %v27
    %31 = vst [vmem:[#allocation6] sm:$0xff] %v30
    // Predicated region
    $region10: #{tpu_custom_call.1} parent=1 // pred_check
      _
    $region11: #{tpu_custom_call.1} parent=1 // pred_check_branch
      %33 = sbr.rel (0) target = $region13
    $region12: #{tpu_custom_call.1} parent=1 // pred_region
      %s35 = ssub.s32 128, 128
      %36 = vsyncadd [#allocation4], %s35
      %s38 = sshll.u32 [#allocation5], 4
      %s39 = int_to_ptr.vmem [resolvable:$true] %s38
      %41 = dma.vmem_to_hbm [thread:$0]  %s39, 128, %s1, [#allocation4]
    $region13: #{tpu_custom_call.1} parent=1 // pred_fallthru
      _
    // Predicated region
    $region14: #{tpu_custom_call.1} parent=1 // pred_check
      _
    $region15: #{tpu_custom_call.1} parent=1 // pred_check_branch
      %43 = sbr.rel (0) target = $region17
    $region16: #{tpu_custom_call.1} parent=1 // pred_region
      %s45 = ssub.s32 128, 128
      %46 = vsyncadd [#allocation7], %s45
      %s48 = sshll.u32 [#allocation6], 4
      %s49 = int_to_ptr.vmem [resolvable:$true] %s48
      %51 = dma.vmem_to_hbm [thread:$0]  %s49, 128, %s2, [#allocation7]
    $region17: #{tpu_custom_call.1} parent=1 // pred_fallthru
      _
    // Predicated region
    $region18: #{tpu_custom_call.1} parent=1 // pred_check
      _
    $region19: #{tpu_custom_call.1} parent=1 // pred_check_branch
      %53 = sbr.rel (0) target = $region21
    $region20: #{tpu_custom_call.1} parent=1 // pred_region
      %54 = dma.done [#allocation4], 128
    $region21: #{tpu_custom_call.1} parent=1 // pred_fallthru
      _
    // Predicated region
    $region22: #{tpu_custom_call.1} parent=1 // pred_check
      _
    $region23: #{tpu_custom_call.1} parent=1 // pred_check_branch
      %56 = sbr.rel (0) target = $region25
    $region24: #{tpu_custom_call.1} parent=1 // pred_region
      %57 = dma.done [#allocation7], 128
    $region25: #{tpu_custom_call.1} parent=1 // pred_fallthru
      _
    %58 = vsyncpa [#allocation3], 1
    %59 = vsyncpa [#allocation4], 1
    %60 = vsyncpa [#allocation7], 1

</llo_original>
